<compile_context>
chip_gen: v7x
topology: tpu7x:2x2x1
jax: 0.10.0
libtpu: 0.0.40
codegen_flags: <defaults>
</compile_context>

<pallas_src>
import functools

import jax
import jax.numpy as jnp
from jax.experimental import pallas as pl
from jax.experimental.pallas import tpu as pltpu

IN_FEATURES = 28 * 28     # 784
HIDDEN = 128
OUT_FEATURES = 10
OUT_PAD = 128             # lane-padded logits / output width
NEG_INF = -1e30           # padded-logit fill; exp(NEG_INF - m) == 0 in f32


def _round_up(n, m):
    return ((n + m - 1) // m) * m


def perceptron_kernel(x_ref, w1_ref, b1_ref, w2_ref, b2_ref, o_ref):
    """Fused MLP tile: fc1 -> relu -> (dropout=id) -> fc2(padded) -> log_softmax.

    x_ref : (TB, 784)  bf16
    w1_ref: (784, 128) bf16
    b1_ref: (1, 128)   f32
    w2_ref: (128, 128) bf16   (cols 10..127 are zero)
    b2_ref: (1, 128)   f32    (cols 10..127 are NEG_INF -> padded logits vanish)
    o_ref : (TB, 128)  f32    (cols 10..127 are garbage; wrapper slices them off)
    """
    # fc1 + ReLU: bf16 operands on the MXU, f32 accumulation.
    h = jnp.dot(x_ref[...], w1_ref[...], preferred_element_type=jnp.float32)
    h = jnp.maximum(h + b1_ref[...], 0.0)

    # dropout2: identity in eval mode.

    # fc2 on lane-padded (128-wide) weights. The NEG_INF padded bias masks the
    # extra 118 columns so the log_softmax normalizer only sees the 10 real logits.
    logits = jnp.dot(h.astype(jnp.bfloat16), w2_ref[...],
                     preferred_element_type=jnp.float32) + b2_ref[...]

    # Numerically stable log_softmax over the last axis (f32 VPU/EUP work).
    m = jnp.max(logits, axis=-1, keepdims=True)
    shifted = logits - m
    lse = jnp.log(jnp.sum(jnp.exp(shifted), axis=-1, keepdims=True))
    o_ref[...] = shifted - lse


def prepare_params(w1, b1, w2, b2):
    """One-time (model-load) prep: transpose to (in, out) layout, pad fc2 to 128
    lanes, cast matmul operands to bf16. Keeps the per-call path free of weight
    transposes / reshapes."""
    w1_t = jnp.asarray(w1, jnp.float32).T.astype(jnp.bfloat16)            # (784, 128)
    b1_2d = jnp.asarray(b1, jnp.float32).reshape(1, HIDDEN)               # (1, 128)
    w2_t = jnp.asarray(w2, jnp.float32).T                                 # (128, 10)
    w2_pad = jnp.zeros((HIDDEN, OUT_PAD), jnp.float32)
    w2_pad = w2_pad.at[:, :OUT_FEATURES].set(w2_t).astype(jnp.bfloat16)   # (128, 128)
    b2_pad = jnp.full((1, OUT_PAD), NEG_INF, jnp.float32)
    b2_pad = b2_pad.at[:, :OUT_FEATURES].set(jnp.asarray(b2, jnp.float32))
    return w1_t, b1_2d, w2_pad, b2_pad


@functools.partial(jax.jit, static_argnames=("tb",))
def perceptron_forward(x_nchw, w1_t, b1_2d, w2_pad, b2_pad, *, tb=512):
    """x_nchw: (B, 1, 28, 28). Weight args must come from prepare_params()."""
    B = x_nchw.shape[0]
    # flatten(x, 1) + bf16 cast (halves the HBM read of the dominant x stream).
    x2d = x_nchw.reshape(B, IN_FEATURES).astype(jnp.bfloat16)

    # Batch tile: multiple of 8 sublanes, capped at `tb`. tb=512 bf16 x-block is
    # ~0.8 MiB -> ~1.6 MiB double-buffered + ~0.25 MiB resident weights: fits the
    # scoped-VMEM defaults on all of v5e / v6e / v7x.
    tb_eff = min(tb, _round_up(B, 8))
    b_pad = _round_up(B, tb_eff)
    if b_pad != B:
        x2d = jnp.pad(x2d, ((0, b_pad - B), (0, 0)))
    grid = (b_pad // tb_eff,)

    flops_per_row = 2 * IN_FEATURES * HIDDEN + 2 * HIDDEN * OUT_PAD
    cost = pl.CostEstimate(
        flops=b_pad * flops_per_row,
        transcendentals=b_pad * (OUT_PAD + 1),                    # exp per logit + log per row
        bytes_accessed=(b_pad * IN_FEATURES * 2                   # x (bf16)
                        + IN_FEATURES * HIDDEN * 2 + HIDDEN * 4   # w1 + b1
                        + HIDDEN * OUT_PAD * 2 + OUT_PAD * 4      # w2 + b2
                        + b_pad * OUT_PAD * 4))                   # out (f32)

    out_padded = pl.pallas_call(
        perceptron_kernel,
        out_shape=jax.ShapeDtypeStruct((b_pad, OUT_PAD), jnp.float32),
        grid=grid,
        in_specs=[
            pl.BlockSpec((tb_eff, IN_FEATURES), lambda i: (i, 0)),   # streamed / pipelined
            pl.BlockSpec((IN_FEATURES, HIDDEN), lambda i: (0, 0)),   # weights stay resident
            pl.BlockSpec((1, HIDDEN), lambda i: (0, 0)),
            pl.BlockSpec((HIDDEN, OUT_PAD), lambda i: (0, 0)),
            pl.BlockSpec((1, OUT_PAD), lambda i: (0, 0)),
        ],
        out_specs=pl.BlockSpec((tb_eff, OUT_PAD), lambda i: (i, 0)),
        compiler_params=pltpu.CompilerParams(
            dimension_semantics=("parallel",)),
        cost_estimate=cost,
    )(x2d, w1_t, b1_2d, w2_pad, b2_pad)

    # Drop batch padding and the 118 lane-padding columns.
    return out_padded[:B, :OUT_FEATURES]


def _reference(x_nchw, w1, b1, w2, b2):
    """Pure-JAX f32 reference of the same forward pass."""
    x = x_nchw.reshape(x_nchw.shape[0], -1).astype(jnp.float32)
    h = jnp.maximum(x @ w1.T + b1, 0.0)
    logits = h @ w2.T + b2
    return jax.nn.log_softmax(logits, axis=1)


if __name__ == "__main__":
    key = jax.random.PRNGKey(0)
    k_x, k_w1, k_b1, k_w2, k_b2 = jax.random.split(key, 5)

    B = 16
    x = jax.random.normal(k_x, (B, 1, 28, 28), dtype=jnp.float32)

    # Deterministic parameter init (matches nn.Linear fan-in uniform bounds).
    bound1 = 1.0 / (IN_FEATURES ** 0.5)
    w1 = jax.random.uniform(k_w1, (HIDDEN, IN_FEATURES), jnp.float32, -bound1, bound1)
    b1 = jax.random.uniform(k_b1, (HIDDEN,), jnp.float32, -bound1, bound1)
    bound2 = 1.0 / (HIDDEN ** 0.5)
    w2 = jax.random.uniform(k_w2, (OUT_FEATURES, HIDDEN), jnp.float32, -bound2, bound2)
    b2 = jax.random.uniform(k_b2, (OUT_FEATURES,), jnp.float32, -bound2, bound2)

    params = prepare_params(w1, b1, w2, b2)

    # tb=8 at this toy batch size -> grid of 2 steps, exercising the tiled/pipelined path.
    out = perceptron_forward(x, *params, tb=8)
    out = jax.block_until_ready(out)

    ref = _reference(x, w1, b1, w2, b2)
    assert out.shape == (B, OUT_FEATURES)
    assert bool(jnp.all(jnp.isfinite(out)))
    # bf16 matmul inputs (f32 accumulation) -> loose tolerance vs. the f32 reference.
    max_diff = float(jnp.max(jnp.abs(out - ref)))
    assert jnp.allclose(out, ref, atol=5e-2, rtol=5e-2), (
        f"mismatch vs JAX reference; max abs diff = {max_diff}")

    print("KERNEL_OK")
</pallas_src>

<mosaic_0001>
module attributes {stable_mosaic.version = 11 : i64} {
  func.func @perceptron_kernel(%arg0: i32, %arg1: memref<8x784xbf16, #tpu.memory_space<vmem>>, %arg2: memref<784x128xbf16, #tpu.memory_space<vmem>>, %arg3: memref<1x128xf32, #tpu.memory_space<vmem>>, %arg4: memref<128x128xbf16, #tpu.memory_space<vmem>>, %arg5: memref<1x128xf32, #tpu.memory_space<vmem>>, %arg6: memref<8x128xf32, #tpu.memory_space<vmem>>) attributes {dimension_semantics = [#tpu.dimension_semantics<parallel>], iteration_bounds = array<i64: 2>, scalar_prefetch = 0 : i64, scratch_operands = 0 : i64, tpu.core_type = #tpu.core_type<tc>, window_params = [{transform_indices = @transform_0, window_bounds = array<i64: 8, 784>}, {pipeline_mode = #tpu.pipeline_mode<synchronous>, transform_indices = @transform_1, window_bounds = array<i64: 784, 128>}, {pipeline_mode = #tpu.pipeline_mode<synchronous>, transform_indices = @transform_2, window_bounds = array<i64: 1, 128>}, {pipeline_mode = #tpu.pipeline_mode<synchronous>, transform_indices = @transform_3, window_bounds = array<i64: 128, 128>}, {pipeline_mode = #tpu.pipeline_mode<synchronous>, transform_indices = @transform_4, window_bounds = array<i64: 1, 128>}, {transform_indices = @transform_5, window_bounds = array<i64: 8, 128>}]} {
    %c0 = arith.constant 0 : index
    %c0_0 = arith.constant 0 : index
    %0 = vector.load %arg1[%c0, %c0_0] : memref<8x784xbf16, #tpu.memory_space<vmem>>, vector<8x784xbf16>
    %c0_1 = arith.constant 0 : index
    %c0_2 = arith.constant 0 : index
    %1 = vector.load %arg2[%c0_1, %c0_2] : memref<784x128xbf16, #tpu.memory_space<vmem>>, vector<784x128xbf16>
    %cst = arith.constant dense<0.000000e+00> : vector<8x128xf32>
    %2 = tpu.matmul %0, %1, %cst {dimension_numbers = #tpu.dot_dimension_numbers<[1], [0], [0], [1], [0, 0, 1, 1], [], []>} : vector<8x784xbf16>, vector<784x128xbf16>, vector<8x128xf32> -> vector<8x128xf32>
    %c0_3 = arith.constant 0 : index
    %c0_4 = arith.constant 0 : index
    %3 = vector.load %arg3[%c0_3, %c0_4] : memref<1x128xf32, #tpu.memory_space<vmem>>, vector<1x128xf32>
    %4 = vector.broadcast %3 : vector<1x128xf32> to vector<8x128xf32>
    %5 = arith.addf %2, %4 : vector<8x128xf32>
    %cst_5 = arith.constant 0.000000e+00 : f32
    %6 = vector.broadcast %cst_5 : f32 to vector<8x128xf32>
    %7 = arith.maximumf %5, %6 : vector<8x128xf32>
    %8 = arith.truncf %7 : vector<8x128xf32> to vector<8x128xbf16>
    %c0_6 = arith.constant 0 : index
    %c0_7 = arith.constant 0 : index
    %9 = vector.load %arg4[%c0_6, %c0_7] : memref<128x128xbf16, #tpu.memory_space<vmem>>, vector<128x128xbf16>
    %cst_8 = arith.constant dense<0.000000e+00> : vector<8x128xf32>
    %10 = tpu.matmul %8, %9, %cst_8 {dimension_numbers = #tpu.dot_dimension_numbers<[1], [0], [0], [1], [0, 0, 1, 1], [], []>} : vector<8x128xbf16>, vector<128x128xbf16>, vector<8x128xf32> -> vector<8x128xf32>
    %c0_9 = arith.constant 0 : index
    %c0_10 = arith.constant 0 : index
    %11 = vector.load %arg5[%c0_9, %c0_10] : memref<1x128xf32, #tpu.memory_space<vmem>>, vector<1x128xf32>
    %12 = vector.broadcast %11 : vector<1x128xf32> to vector<8x128xf32>
    %13 = arith.addf %10, %12 : vector<8x128xf32>
    %cst_11 = arith.constant dense<0xFF800000> : vector<8xf32>
    %14 = vector.multi_reduction <maximumf>, %13, %cst_11 [1] : vector<8x128xf32> to vector<8xf32>
    %15 = vector.shape_cast %14 : vector<8xf32> to vector<8x1xf32>
    %16 = vector.broadcast %15 : vector<8x1xf32> to vector<8x128xf32>
    %17 = arith.subf %13, %16 : vector<8x128xf32>
    %18 = math.exp %17 : vector<8x128xf32>
    %cst_12 = arith.constant dense<0.000000e+00> : vector<8xf32>
    %19 = vector.multi_reduction <add>, %18, %cst_12 [1] : vector<8x128xf32> to vector<8xf32>
    %20 = vector.shape_cast %19 : vector<8xf32> to vector<8x1xf32>
    %21 = math.log %20 : vector<8x1xf32>
    %22 = vector.broadcast %21 : vector<8x1xf32> to vector<8x128xf32>
    %23 = arith.subf %17, %22 : vector<8x128xf32>
    %c0_13 = arith.constant 0 : index
    %c0_14 = arith.constant 0 : index
    %24 = vector.load %arg6[%c0_13, %c0_14] : memref<8x128xf32, #tpu.memory_space<vmem>>, vector<8x128xf32>
    tpu.vector_store %arg6[%c0_13, %c0_14], %23 {strides = array<i32>} : memref<8x128xf32, #tpu.memory_space<vmem>>, vector<8x128xf32>,
    return
  }
  func.func @transform_0(%arg0: i32) -> (i32, i32) {
    %c0_i32 = arith.constant 0 : i32
    %c0_i32_0 = arith.constant 0 : i32
    return %arg0, %c0_i32 : i32, i32
  }
  func.func @transform_1(%arg0: i32) -> (i32, i32) {
    %c0_i32 = arith.constant 0 : i32
    %c0_i32_0 = arith.constant 0 : i32
    %c0_i32_1 = arith.constant 0 : i32
    return %c0_i32, %c0_i32_0 : i32, i32
  }
  func.func @transform_2(%arg0: i32) -> (i32, i32) {
    %c0_i32 = arith.constant 0 : i32
    %c0_i32_0 = arith.constant 0 : i32
    %c0_i32_1 = arith.constant 0 : i32
    return %c0_i32, %c0_i32_0 : i32, i32
  }
  func.func @transform_3(%arg0: i32) -> (i32, i32) {
    %c0_i32 = arith.constant 0 : i32
    %c0_i32_0 = arith.constant 0 : i32
    %c0_i32_1 = arith.constant 0 : i32
    return %c0_i32, %c0_i32_0 : i32, i32
  }
  func.func @transform_4(%arg0: i32) -> (i32, i32) {
    %c0_i32 = arith.constant 0 : i32
    %c0_i32_0 = arith.constant 0 : i32
    %c0_i32_1 = arith.constant 0 : i32
    return %c0_i32, %c0_i32_0 : i32, i32
  }
  func.func @transform_5(%arg0: i32) -> (i32, i32) {
    %c0_i32 = arith.constant 0 : i32
    %c0_i32_0 = arith.constant 0 : i32
    return %arg0, %c0_i32 : i32, i32
  }
}

</mosaic_0001>

<llo_original>
// kernel: perceptron_forward.1
$region0: #{perceptron_forward.1}
  #allocation0 [shape = 'u32[]', space=smem, size = 0x4, offset = 0x4, fixed_abs, tag = 'smem constant byte address 0x4 - core index']
  #allocation1 [shape = 'u32[144,128]{1,0:T(1,128)}', space=vmem, size = 0x12000, scoped, tag = 'internal scratch']
  %s0 = inlined_call_operand.vmem [shape: bf16[16,784], index: 0, kind: input, shape index: {}]
  %s1 = inlined_call_operand.vmem [shape: bf16[784,128], index: 1, kind: input, shape index: {}]
  %s2 = inlined_call_operand.vmem [shape: f32[1,128], index: 2, kind: input, shape index: {}]
  %s3 = inlined_call_operand.vmem [shape: bf16[128,128], index: 3, kind: input, shape index: {}]
  %s4 = inlined_call_operand.vmem [shape: f32[1,128], index: 4, kind: input, shape index: {}]
  %s5 = inlined_call_operand.hbm [shape: f32[16,128], index: 5, kind: output, shape index: {}]
  %s6 = sld [smem:[#allocation0]]
  $region53: #{perceptron_forward.1} parent=0
    _
  %s8 = ssub.s32 1, %s6
  %s9 = scalar_select 0, %s8, %s6
  $region1: #{perceptron_forward.1} parent=0
    #allocation2 [shape = 'u8[8192]{0}', space=vmem, size = 0x2000, scoped, tag = 'output window, operand 0']
    #allocation3 [shape = 's32[2]{0}', space=sflag, size = 0x8, scoped, tag = 'scoped memory for perceptron_forward.1']
    %10 = vsyncpa [#allocation3], 0
    %s11 = scalar_lea.sflag [#allocation3], 1
    %12 = vsyncpa %s11, 0
    loop: start=0, step=1, limit=4
    $region2: #{perceptron_forward.1} parent=1 // loop_pre_header
      _
    $region3: #{perceptron_forward.1} parent=1 // loop_header
      %s14 = sphi 0, %s18
      %p15 = scmp.ge.s32.totalorder %s14, 4
      %s24 = sphi 0, %s26
      %s27 = sphi 0, %s24
      %s28 = sphi 0, %s27
      %s44 = sphi 0, %s28
      %s48 = sphi 0, %s48
      %s50 = sphi 0, %s48
      %s51 = sphi 0, %s50
      %s65 = sphi 0, %s51
      %s69 = sphi 0, %s69
      %s71 = sphi 0, %s69
      %s72 = sphi 0, %s71
      %s86 = sphi 0, %s72
      %s90 = sphi 0, %s90
      %s92 = sphi 0, %s90
      %s93 = sphi 0, %s92
      %s107 = sphi 0, %s93
      %s111 = sphi 0, %s111
      %s113 = sphi 0, %s111
      %s114 = sphi 0, %s113
      %s128 = sphi 0, %s114
      %s134 = sphi 0, %s136
      %s137 = sphi 0, %s134
      %s138 = sphi 0, %s137
      %s154 = sphi 0, %s138
    $region4: #{perceptron_forward.1} parent=1 // loop_header_branch
      %17 = sbr.rel (%p15) target = $region8
    $region5: #{perceptron_forward.1} parent=1 // loop_body
      %s19 = ssub.s32 %s14, 1
      %s20 = ssub.s32 %s14, 2
      %s21 = sadd.s32 %s14, 1
      %s22 = ssub.s32 %s14, %s21
      %p23 = scmp.eq.s32.totalorder %s22, 0
      %s25 = sadd.s32 %s24, 1
      %s26 = scalar_select %p23, %s24, %s25
      %p29 = pneg %p23
      %p30 = scmp.eq.s32.totalorder %s14, 1
      %p31 = por %p29, %p30
      %p32 = scmp.ne.s32.totalorder %s24, %s27
      %p33 = scmp.eq.s32.totalorder %s14, 0
      %p34 = por %p32, %p33
      %p35 = scmp.ne.s32.totalorder %s24, %s27
      %p36 = scmp.eq.s32.totalorder %s19, 1
      %p37 = por %p35, %p36
      %p38 = scmp.ne.s32.totalorder %s27, %s28
      %p39 = scmp.eq.s32.totalorder %s19, 0
      %p40 = por %p38, %p39
      %p41 = scmp.ne.s32.totalorder %s27, %s28
      %p42 = scmp.eq.s32.totalorder %s20, 1
      %p43 = por %p41, %p42
      %p45 = scmp.ne.s32.totalorder %s28, %s44
      %p46 = scmp.eq.s32.totalorder %s20, 0
      %p47 = por %p45, %p46
      %s49 = sadd.s32 %s48, 1
      %p52 = scmp.eq.s32.totalorder %s14, 1
      %p53 = scmp.ne.s32.totalorder %s48, %s50
      %p54 = scmp.eq.s32.totalorder %s14, 0
      %p55 = por %p53, %p54
      %p56 = scmp.ne.s32.totalorder %s48, %s50
      %p57 = scmp.eq.s32.totalorder %s19, 1
      %p58 = por %p56, %p57
      %p59 = scmp.ne.s32.totalorder %s50, %s51
      %p60 = scmp.eq.s32.totalorder %s19, 0
      %p61 = por %p59, %p60
      %p62 = scmp.ne.s32.totalorder %s50, %s51
      %p63 = scmp.eq.s32.totalorder %s20, 1
      %p64 = por %p62, %p63
      %p66 = scmp.ne.s32.totalorder %s51, %s65
      %p67 = scmp.eq.s32.totalorder %s20, 0
      %p68 = por %p66, %p67
      %s70 = sadd.s32 %s69, 1
      %p73 = scmp.eq.s32.totalorder %s14, 1
      %p74 = scmp.ne.s32.totalorder %s69, %s71
      %p75 = scmp.eq.s32.totalorder %s14, 0
      %p76 = por %p74, %p75
      %p77 = scmp.ne.s32.totalorder %s69, %s71
      %p78 = scmp.eq.s32.totalorder %s19, 1
      %p79 = por %p77, %p78
      %p80 = scmp.ne.s32.totalorder %s71, %s72
      %p81 = scmp.eq.s32.totalorder %s19, 0
      %p82 = por %p80, %p81
      %p83 = scmp.ne.s32.totalorder %s71, %s72
      %p84 = scmp.eq.s32.totalorder %s20, 1
      %p85 = por %p83, %p84
      %p87 = scmp.ne.s32.totalorder %s72, %s86
      %p88 = scmp.eq.s32.totalorder %s20, 0
      %p89 = por %p87, %p88
      %s91 = sadd.s32 %s90, 1
      %p94 = scmp.eq.s32.totalorder %s14, 1
      %p95 = scmp.ne.s32.totalorder %s90, %s92
      %p96 = scmp.eq.s32.totalorder %s14, 0
      %p97 = por %p95, %p96
      %p98 = scmp.ne.s32.totalorder %s90, %s92
      %p99 = scmp.eq.s32.totalorder %s19, 1
      %p100 = por %p98, %p99
      %p101 = scmp.ne.s32.totalorder %s92, %s93
      %p102 = scmp.eq.s32.totalorder %s19, 0
      %p103 = por %p101, %p102
      %p104 = scmp.ne.s32.totalorder %s92, %s93
      %p105 = scmp.eq.s32.totalorder %s20, 1
      %p106 = por %p104, %p105
      %p108 = scmp.ne.s32.totalorder %s93, %s107
      %p109 = scmp.eq.s32.totalorder %s20, 0
      %p110 = por %p108, %p109
      %s112 = sadd.s32 %s111, 1
      %p115 = scmp.eq.s32.totalorder %s14, 1
      %p116 = scmp.ne.s32.totalorder %s111, %s113
      %p117 = scmp.eq.s32.totalorder %s14, 0
      %p118 = por %p116, %p117
      %p119 = scmp.ne.s32.totalorder %s111, %s113
      %p120 = scmp.eq.s32.totalorder %s19, 1
      %p121 = por %p119, %p120
      %p122 = scmp.ne.s32.totalorder %s113, %s114
      %p123 = scmp.eq.s32.totalorder %s19, 0
      %p124 = por %p122, %p123
      %p125 = scmp.ne.s32.totalorder %s113, %s114
      %p126 = scmp.eq.s32.totalorder %s20, 1
      %p127 = por %p125, %p126
      %p129 = scmp.ne.s32.totalorder %s114, %s128
      %p130 = scmp.eq.s32.totalorder %s20, 0
      %p131 = por %p129, %p130
      %s132 = ssub.s32 %s14, %s21
      %p133 = scmp.eq.s32.totalorder %s132, 0
      %s135 = sadd.s32 %s134, 1
      %s136 = scalar_select %p133, %s134, %s135
      %p139 = pneg %p133
      %p140 = scmp.eq.s32.totalorder %s14, 1
      %p141 = por %p139, %p140
      %p142 = scmp.ne.s32.totalorder %s134, %s137
      %p143 = scmp.eq.s32.totalorder %s14, 0
      %p144 = por %p142, %p143
      %p145 = scmp.ne.s32.totalorder %s134, %s137
      %p146 = scmp.eq.s32.totalorder %s19, 1
      %p147 = por %p145, %p146
      %p148 = scmp.ne.s32.totalorder %s137, %s138
      %p149 = scmp.eq.s32.totalorder %s19, 0
      %p150 = por %p148, %p149
      %p151 = scmp.ne.s32.totalorder %s137, %s138
      %p152 = scmp.eq.s32.totalorder %s20, 1
      %p153 = por %p151, %p152
      %p155 = scmp.ne.s32.totalorder %s138, %s154
      %p156 = scmp.eq.s32.totalorder %s20, 0
      %p157 = por %p155, %p156
      %p158 = scmp.le.s32.totalorder 1, %s14
      %p159 = scmp.lt.s32.totalorder %s14, 3
      %p160 = pnand %p158, %p159
      %p161 = pneg %p160
      // Predicated region
      $region9: #{perceptron_forward.1} parent=5 // pred_check
        _
      $region10: #{perceptron_forward.1} parent=5 // pred_check_branch
        %163 = sbr.rel (%p160) target = $region12
      $region11: #{perceptron_forward.1} parent=5 // pred_region
        %s164 = ssub.s32 %s14, 1
        // Predicated region
        $region13: #{perceptron_forward.1} parent=11 // pred_check
          %p165 = pneg %p61
        $region14: #{perceptron_forward.1} parent=11 // pred_check_branch
          %167 = sbr.rel (%p165) target = $region16
        $region15: #{perceptron_forward.1} parent=11 // pred_region
          _
        $region16: #{perceptron_forward.1} parent=11 // pred_fallthru
          _
        // Predicated region
        $region17: #{perceptron_forward.1} parent=11 // pred_check
          %p168 = pneg %p82
        $region18: #{perceptron_forward.1} parent=11 // pred_check_branch
          %170 = sbr.rel (%p168) target = $region20
        $region19: #{perceptron_forward.1} parent=11 // pred_region
          _
        $region20: #{perceptron_forward.1} parent=11 // pred_fallthru
          _
        // Predicated region
        $region21: #{perceptron_forward.1} parent=11 // pred_check
          %p171 = pneg %p103
        $region22: #{perceptron_forward.1} parent=11 // pred_check_branch
          %173 = sbr.rel (%p171) target = $region24
        $region23: #{perceptron_forward.1} parent=11 // pred_region
          _
        $region24: #{perceptron_forward.1} parent=11 // pred_fallthru
          _
        // Predicated region
        $region25: #{perceptron_forward.1} parent=11 // pred_check
          %p174 = pneg %p124
        $region26: #{perceptron_forward.1} parent=11 // pred_check_branch
          %176 = sbr.rel (%p174) target = $region28
        $region27: #{perceptron_forward.1} parent=11 // pred_region
          _
        $region28: #{perceptron_forward.1} parent=11 // pred_fallthru
          _
      $region12: #{perceptron_forward.1} parent=5 // pred_fallthru
        _
      %p177 = scmp.lt.s32.totalorder %s14, 2
      // Predicated region
      $region29: #{perceptron_forward.1} parent=5 // pred_check
        %p178 = pneg %p177
      $region30: #{perceptron_forward.1} parent=5 // pred_check_branch
        %180 = sbr.rel (%p178) target = $region32
      $region31: #{perceptron_forward.1} parent=5 // pred_region
        // Predicated region
        $region33: #{perceptron_forward.1} parent=31 // pred_check
          %p181 = pneg %p34
        $region34: #{perceptron_forward.1} parent=31 // pred_check_branch
          %183 = sbr.rel (%p181) target = $region36
        $region35: #{perceptron_forward.1} parent=31 // pred_region
          %p184 = scmp.lt.s32.totalorder %s14, 1
          %s185 = scalar_select %p184, %s14, 1
          %s186 = smul.addr %s185, 7
          %s187 = smul.addr %s186, 4
          %s188 = scalar_lea.vmem %s0, %s187
        $region36: #{perceptron_forward.1} parent=31 // pred_fallthru
          _
      $region32: #{perceptron_forward.1} parent=5 // pred_fallthru
        _
      %p189 = scmp.le.s32.totalorder 1, %s14
      %p190 = scmp.lt.s32.totalorder %s14, 3
      %p191 = pnand %p189, %p190
      %p192 = pneg %p191
      // Predicated region
      $region37: #{perceptron_forward.1} parent=5 // pred_check
        _
      $region38: #{perceptron_forward.1} parent=5 // pred_check_branch
        %194 = sbr.rel (%p191) target = $region40
      $region39: #{perceptron_forward.1} parent=5 // pred_region
        %s195 = ssub.s32 %s14, 1
        %p196 = scmp.lt.s32.totalorder %s19, 1
        %s197 = scalar_select %p196, %s19, 1
        %s198 = smul.addr %s197, 7
        %s199 = smul.addr %s198, 4
        %s200 = scalar_lea.vmem %s0, %s199
        %p201 = pneg %p40
        %p202 = pneg %p37
        %p203 = pneg %p61
        %p204 = pneg %p58
        %p205 = pneg %p82
        %p206 = pneg %p79
        %p207 = pneg %p103
        %p208 = pneg %p100
        %p209 = pneg %p124
        %p210 = pneg %p121
        %p211 = pneg %p150
        %p212 = pneg %p147
        %s213 = sand.u32 %s137, 1
        %s214 = scalar_lea.sflag [#allocation3], %s213
        %s215 = sand.u32 %s137, 1
        %s216 = smul.addr %s215, 8
        %s217 = scalar_lea.vmem [#allocation2], %s216
        %p218 = scmp.lt.s32.totalorder %s19, 1
        %s219 = scalar_select %p218, %s19, 1
        %s220 = smul.addr %s219, 7
        %s221 = smul.addr %s220, 4
        %s222 = scalar_lea.vmem %s0, %s221
        %v224 = vld [vmem:[%s222] sm:$0xff]
        %v225 = vld [vmem:[%s222 + $0x8] sm:$0xff]
        %v226 = vld [vmem:[%s222 + $0x10] sm:$0xff]
        %v227 = vld [vmem:[%s222 + $0x18] sm:$0xf]
        %v228 = vld [vmem:[%s1] sm:$0xf]
        %v229 = vld [vmem:[%s1 + $0x4] sm:$0xf]
        %v230 = vld [vmem:[%s1 + $0x8] sm:$0xf]
        %v231 = vld [vmem:[%s1 + $0xc] sm:$0xf]
        %v232 = vld [vmem:[%s1 + $0x10] sm:$0xf]
        %v233 = vld [vmem:[%s1 + $0x14] sm:$0xf]
        %v234 = vld [vmem:[%s1 + $0x18] sm:$0xf]
        %v235 = vld [vmem:[%s1 + $0x1c] sm:$0xf]
        %v236 = vld [vmem:[%s1 + $0x20] sm:$0xf]
        %v237 = vld [vmem:[%s1 + $0x24] sm:$0xf]
        %v238 = vld [vmem:[%s1 + $0x28] sm:$0xf]
        %v239 = vld [vmem:[%s1 + $0x2c] sm:$0xf]
        %v240 = vld [vmem:[%s1 + $0x30] sm:$0xf]
        %v241 = vld [vmem:[%s1 + $0x34] sm:$0xf]
        %v242 = vld [vmem:[%s1 + $0x38] sm:$0xf]
        %v243 = vld [vmem:[%s1 + $0x3c] sm:$0xf]
        %v244 = vld [vmem:[%s1 + $0x40] sm:$0xf]
        %v245 = vld [vmem:[%s1 + $0x44] sm:$0xf]
        %v246 = vld [vmem:[%s1 + $0x48] sm:$0xf]
        %v247 = vld [vmem:[%s1 + $0x4c] sm:$0xf]
        %v248 = vld [vmem:[%s1 + $0x50] sm:$0xf]
        %v249 = vld [vmem:[%s1 + $0x54] sm:$0xf]
        %v250 = vld [vmem:[%s1 + $0x58] sm:$0xf]
        %v251 = vld [vmem:[%s1 + $0x5c] sm:$0xf]
        %v252 = vld [vmem:[%s1 + $0x60] sm:$0xf]
        %v253 = vld [vmem:[%s1 + $0x64] sm:$0xf]
        %v254 = vld [vmem:[%s1 + $0x68] sm:$0xf]
        %v255 = vld [vmem:[%s1 + $0x6c] sm:$0xf]
        %v256 = vld [vmem:[%s1 + $0x70] sm:$0xf]
        %v257 = vld [vmem:[%s1 + $0x74] sm:$0xf]
        %v258 = vld [vmem:[%s1 + $0x78] sm:$0xf]
        %v259 = vld [vmem:[%s1 + $0x7c] sm:$0xf]
        %v260 = vld [vmem:[%s1 + $0x80] sm:$0xf]
        %v261 = vld [vmem:[%s1 + $0x84] sm:$0xf]
        %v262 = vld [vmem:[%s1 + $0x88] sm:$0xf]
        %v263 = vld [vmem:[%s1 + $0x8c] sm:$0xf]
        %v264 = vld [vmem:[%s1 + $0x90] sm:$0xf]
        %v265 = vld [vmem:[%s1 + $0x94] sm:$0xf]
        %v266 = vld [vmem:[%s1 + $0x98] sm:$0xf]
        %v267 = vld [vmem:[%s1 + $0x9c] sm:$0xf]
        %v268 = vld [vmem:[%s1 + $0xa0] sm:$0xf]
        %v269 = vld [vmem:[%s1 + $0xa4] sm:$0xf]
        %v270 = vld [vmem:[%s1 + $0xa8] sm:$0xf]
        %v271 = vld [vmem:[%s1 + $0xac] sm:$0xf]
        %v272 = vld [vmem:[%s1 + $0xb0] sm:$0xf]
        %v273 = vld [vmem:[%s1 + $0xb4] sm:$0xf]
        %v274 = vld [vmem:[%s1 + $0xb8] sm:$0xf]
        %v275 = vld [vmem:[%s1 + $0xbc] sm:$0xf]
        %v276 = vld [vmem:[%s1 + $0xc0] sm:$0xf]
        %v277 = vld [vmem:[%s1 + $0xc4] sm:$0xf]
        %v278 = vld [vmem:[%s1 + $0xc8] sm:$0xf]
        %v279 = vld [vmem:[%s1 + $0xcc] sm:$0xf]
        %v280 = vld [vmem:[%s1 + $0xd0] sm:$0xf]
        %v281 = vld [vmem:[%s1 + $0xd4] sm:$0xf]
        %v282 = vld [vmem:[%s1 + $0xd8] sm:$0xf]
        %v283 = vld [vmem:[%s1 + $0xdc] sm:$0xf]
        %v284 = vld [vmem:[%s1 + $0xe0] sm:$0xf]
        %v285 = vld [vmem:[%s1 + $0xe4] sm:$0xf]
        %v286 = vld [vmem:[%s1 + $0xe8] sm:$0xf]
        %v287 = vld [vmem:[%s1 + $0xec] sm:$0xf]
        %v288 = vld [vmem:[%s1 + $0xf0] sm:$0xf]
        %v289 = vld [vmem:[%s1 + $0xf4] sm:$0xf]
        %v290 = vld [vmem:[%s1 + $0xf8] sm:$0xf]
        %v291 = vld [vmem:[%s1 + $0xfc] sm:$0xf]
        %v292 = vld [vmem:[%s1 + $0x100] sm:$0xf]
        %v293 = vld [vmem:[%s1 + $0x104] sm:$0xf]
        %v294 = vld [vmem:[%s1 + $0x108] sm:$0xf]
        %v295 = vld [vmem:[%s1 + $0x10c] sm:$0xf]
        %v296 = vld [vmem:[%s1 + $0x110] sm:$0xf]
        %v297 = vld [vmem:[%s1 + $0x114] sm:$0xf]
        %v298 = vld [vmem:[%s1 + $0x118] sm:$0xf]
        %v299 = vld [vmem:[%s1 + $0x11c] sm:$0xf]
        %v300 = vld [vmem:[%s1 + $0x120] sm:$0xf]
        %v301 = vld [vmem:[%s1 + $0x124] sm:$0xf]
        %v302 = vld [vmem:[%s1 + $0x128] sm:$0xf]
        %v303 = vld [vmem:[%s1 + $0x12c] sm:$0xf]
        %v304 = vld [vmem:[%s1 + $0x130] sm:$0xf]
        %v305 = vld [vmem:[%s1 + $0x134] sm:$0xf]
        %v306 = vld [vmem:[%s1 + $0x138] sm:$0xf]
        %v307 = vld [vmem:[%s1 + $0x13c] sm:$0xf]
        %v308 = vld [vmem:[%s1 + $0x140] sm:$0xf]
        %v309 = vld [vmem:[%s1 + $0x144] sm:$0xf]
        %v310 = vld [vmem:[%s1 + $0x148] sm:$0xf]
        %v311 = vld [vmem:[%s1 + $0x14c] sm:$0xf]
        %v312 = vld [vmem:[%s1 + $0x150] sm:$0xf]
        %v313 = vld [vmem:[%s1 + $0x154] sm:$0xf]
        %v314 = vld [vmem:[%s1 + $0x158] sm:$0xf]
        %v315 = vld [vmem:[%s1 + $0x15c] sm:$0xf]
        %v316 = vld [vmem:[%s1 + $0x160] sm:$0xf]
        %v317 = vld [vmem:[%s1 + $0x164] sm:$0xf]
        %v318 = vld [vmem:[%s1 + $0x168] sm:$0xf]
        %v319 = vld [vmem:[%s1 + $0x16c] sm:$0xf]
        %v320 = vld [vmem:[%s1 + $0x170] sm:$0xf]
        %v321 = vld [vmem:[%s1 + $0x174] sm:$0xf]
        %v322 = vld [vmem:[%s1 + $0x178] sm:$0xf]
        %v323 = vld [vmem:[%s1 + $0x17c] sm:$0xf]
        %v324 = vld [vmem:[%s1 + $0x180] sm:$0xf]
        %v325 = vld [vmem:[%s1 + $0x184] sm:$0xf]
        %v326 = vld [vmem:[%s2] sm:$0x1]
        %v328 = vlaneseq
        %v329 = vshrl.u32 %v328, 7
        %v330 = vsub.s32 0, %v329
        %v331 = vrot.slane %v326, %v330
        %v337 = vunpack.c.l.b16 %v224
        %v338 = vunpack.c.h.b16 %v224
        %v339 = vunpack.c.l.b16 %v225
        %v340 = vunpack.c.h.b16 %v225
        %v341 = vunpack.c.l.b16 %v226
        %v342 = vunpack.c.h.b16 %v226
        %v343 = vunpack.c.l.b16 %v227
        %v344 = vpack.c.b16 %v337, %v337
        %v345 = vpack.c.b16 %v338, %v338
        %v346 = vpack.c.b16 %v339, %v339
        %v347 = vpack.c.b16 %v340, %v340
        %v348 = vpack.c.b16 %v341, %v341
        %v349 = vpack.c.b16 %v342, %v342
        %v350 = vpack.c.b16 %v343, %v343
        %v455 = vunpack.c.l.b16 %v228
        %v456 = vunpack.c.l.b16 %v229
        %v457 = vunpack.c.l.b16 %v230
        %v458 = vunpack.c.l.b16 %v231
        %v459 = vunpack.c.l.b16 %v232
        %v460 = vunpack.c.l.b16 %v233
        %v461 = vunpack.c.l.b16 %v234
        %v462 = vunpack.c.l.b16 %v235
        %v463 = vunpack.c.l.b16 %v236
        %v464 = vunpack.c.l.b16 %v237
        %v465 = vunpack.c.l.b16 %v238
        %v466 = vunpack.c.l.b16 %v239
        %v467 = vunpack.c.l.b16 %v240
        %v468 = vunpack.c.l.b16 %v241
        %v469 = vunpack.c.l.b16 %v242
        %v470 = vunpack.c.l.b16 %v243
        %v471 = vunpack.c.l.b16 %v244
        %v472 = vunpack.c.l.b16 %v245
        %v473 = vunpack.c.l.b16 %v246
        %v474 = vunpack.c.l.b16 %v247
        %v475 = vunpack.c.l.b16 %v248
        %v476 = vunpack.c.l.b16 %v249
        %v477 = vunpack.c.l.b16 %v250
        %v478 = vunpack.c.l.b16 %v251
        %v479 = vunpack.c.l.b16 %v252
        %v480 = vunpack.c.l.b16 %v253
        %v481 = vunpack.c.l.b16 %v254
        %v482 = vunpack.c.l.b16 %v255
        %v483 = vunpack.c.l.b16 %v256
        %v484 = vunpack.c.l.b16 %v257
        %v485 = vunpack.c.l.b16 %v258
        %v486 = vunpack.c.l.b16 %v259
        %v487 = vunpack.c.l.b16 %v260
        %v488 = vunpack.c.l.b16 %v261
        %v489 = vunpack.c.l.b16 %v262
        %v490 = vunpack.c.l.b16 %v263
        %v491 = vunpack.c.l.b16 %v264
        %v492 = vunpack.c.l.b16 %v265
        %v493 = vunpack.c.l.b16 %v266
        %v494 = vunpack.c.l.b16 %v267
        %v495 = vunpack.c.l.b16 %v268
        %v496 = vunpack.c.l.b16 %v269
        %v497 = vunpack.c.l.b16 %v270
        %v498 = vunpack.c.l.b16 %v271
        %v499 = vunpack.c.l.b16 %v272
        %v500 = vunpack.c.l.b16 %v273
        %v501 = vunpack.c.l.b16 %v274
        %v502 = vunpack.c.l.b16 %v275
        %v503 = vunpack.c.l.b16 %v276
        %v504 = vunpack.c.l.b16 %v277
        %v505 = vunpack.c.l.b16 %v278
        %v506 = vunpack.c.l.b16 %v279
        %v507 = vunpack.c.l.b16 %v280
        %v508 = vunpack.c.l.b16 %v281
        %v509 = vunpack.c.l.b16 %v282
        %v510 = vunpack.c.l.b16 %v283
        %v511 = vunpack.c.l.b16 %v284
        %v512 = vunpack.c.l.b16 %v285
        %v513 = vunpack.c.l.b16 %v286
        %v514 = vunpack.c.l.b16 %v287
        %v515 = vunpack.c.l.b16 %v288
        %v516 = vunpack.c.l.b16 %v289
        %v517 = vunpack.c.l.b16 %v290
        %v518 = vunpack.c.l.b16 %v291
        %v519 = vunpack.c.l.b16 %v292
        %v520 = vunpack.c.l.b16 %v293
        %v521 = vunpack.c.l.b16 %v294
        %v522 = vunpack.c.l.b16 %v295
        %v523 = vunpack.c.l.b16 %v296
        %v524 = vunpack.c.l.b16 %v297
        %v525 = vunpack.c.l.b16 %v298
        %v526 = vunpack.c.l.b16 %v299
        %v527 = vunpack.c.l.b16 %v300
        %v528 = vunpack.c.l.b16 %v301
        %v529 = vunpack.c.l.b16 %v302
        %v530 = vunpack.c.l.b16 %v303
        %v531 = vunpack.c.l.b16 %v304
        %v532 = vunpack.c.l.b16 %v305
        %v533 = vunpack.c.l.b16 %v306
        %v534 = vunpack.c.l.b16 %v307
        %v535 = vunpack.c.l.b16 %v308
        %v536 = vunpack.c.l.b16 %v309
        %v537 = vunpack.c.l.b16 %v310
        %v538 = vunpack.c.l.b16 %v311
        %v539 = vunpack.c.l.b16 %v312
        %v540 = vunpack.c.l.b16 %v313
        %v541 = vunpack.c.l.b16 %v314
        %v542 = vunpack.c.l.b16 %v315
        %v543 = vunpack.c.l.b16 %v316
        %v544 = vunpack.c.l.b16 %v317
        %v545 = vunpack.c.l.b16 %v318
        %v546 = vunpack.c.l.b16 %v319
        %v547 = vunpack.c.l.b16 %v320
        %v548 = vunpack.c.l.b16 %v321
        %v549 = vunpack.c.l.b16 %v322
        %v550 = vunpack.c.l.b16 %v323
        %v551 = vunpack.c.l.b16 %v324
        %v552 = vunpack.c.l.b16 %v325
        %v553 = vpack.c.b16 %v456, %v455
        %v554 = vpack.c.b16 %v458, %v457
        %v555 = vpack.c.b16 %v460, %v459
        %v556 = vpack.c.b16 %v462, %v461
        %v557 = vpack.c.b16 %v464, %v463
        %v558 = vpack.c.b16 %v466, %v465
        %v559 = vpack.c.b16 %v468, %v467
        %v560 = vpack.c.b16 %v470, %v469
        %v561 = vpack.c.b16 %v472, %v471
        %v562 = vpack.c.b16 %v474, %v473
        %v563 = vpack.c.b16 %v476, %v475
        %v564 = vpack.c.b16 %v478, %v477
        %v565 = vpack.c.b16 %v480, %v479
        %v566 = vpack.c.b16 %v482, %v481
        %v567 = vpack.c.b16 %v484, %v483
        %v568 = vpack.c.b16 %v486, %v485
        %v569 = vpack.c.b16 %v488, %v487
        %v570 = vpack.c.b16 %v490, %v489
        %v571 = vpack.c.b16 %v492, %v491
        %v572 = vpack.c.b16 %v494, %v493
        %v573 = vpack.c.b16 %v496, %v495
        %v574 = vpack.c.b16 %v498, %v497
        %v575 = vpack.c.b16 %v500, %v499
        %v576 = vpack.c.b16 %v502, %v501
        %v577 = vpack.c.b16 %v504, %v503
        %v578 = vpack.c.b16 %v506, %v505
        %v579 = vpack.c.b16 %v508, %v507
        %v580 = vpack.c.b16 %v510, %v509
        %v581 = vpack.c.b16 %v512, %v511
        %v582 = vpack.c.b16 %v514, %v513
        %v583 = vpack.c.b16 %v516, %v515
        %v584 = vpack.c.b16 %v518, %v517
        %v585 = vpack.c.b16 %v520, %v519
        %v586 = vpack.c.b16 %v522, %v521
        %v587 = vpack.c.b16 %v524, %v523
        %v588 = vpack.c.b16 %v526, %v525
        %v589 = vpack.c.b16 %v528, %v527
        %v590 = vpack.c.b16 %v530, %v529
        %v591 = vpack.c.b16 %v532, %v531
        %v592 = vpack.c.b16 %v534, %v533
        %v593 = vpack.c.b16 %v536, %v535
        %v594 = vpack.c.b16 %v538, %v537
        %v595 = vpack.c.b16 %v540, %v539
        %v596 = vpack.c.b16 %v542, %v541
        %v597 = vpack.c.b16 %v544, %v543
        %v598 = vpack.c.b16 %v546, %v545
        %v599 = vpack.c.b16 %v548, %v547
        %v600 = vpack.c.b16 %v550, %v549
        %v601 = vpack.c.b16 %v552, %v551
        %vm651 = vcmask 130048
        %v653 = vsel %vm651, %v350, 0
        %655 = vmatprep.subr.bf16.mxu0 0
        %656 = vmatpush1.bf16.msra.mxu0 %v553
        %657 = vmatprep.subr.bf16.mxu0 0
        %658 = vmatpush1.bf16.msra.mxu0 %v554
        %659 = vmatprep.subr.bf16.mxu0 0
        %660 = vmatpush1.bf16.msra.mxu0 %v555
        %661 = vmatprep.subr.bf16.mxu0 0
        %662 = vmatpush1.bf16.msra.mxu0 %v556
        %663 = vmatprep.subr.bf16.mxu0 0
        %664 = vmatpush1.bf16.msra.mxu0 %v557
        %665 = vmatprep.subr.bf16.mxu0 0
        %666 = vmatpush1.bf16.msra.mxu0 %v558
        %667 = vmatprep.subr.bf16.mxu0 0
        %668 = vmatpush1.bf16.msra.mxu0 %v559
        %669 = vmatprep.subr.bf16.mxu0 0
        %670 = vmatpush1.bf16.msra.mxu0 %v560
        %671 = vmatprep.subr.bf16.mxu0 0
        %672 = vmatpush1.bf16.msra.mxu0 %v561
        %673 = vmatprep.subr.bf16.mxu0 0
        %674 = vmatpush1.bf16.msra.mxu0 %v562
        %675 = vmatprep.subr.bf16.mxu0 0
        %676 = vmatpush1.bf16.msra.mxu0 %v563
        %677 = vmatprep.subr.bf16.mxu0 0
        %678 = vmatpush1.bf16.msra.mxu0 %v564
        %679 = vmatprep.subr.bf16.mxu0 0
        %680 = vmatpush1.bf16.msra.mxu0 %v565
        %681 = vmatprep.subr.bf16.mxu0 0
        %682 = vmatpush1.bf16.msra.mxu0 %v566
        %683 = vmatprep.subr.bf16.mxu0 0
        %684 = vmatpush1.bf16.msra.mxu0 %v567
        %685 = vmatprep.subr.bf16.mxu0 0
        %686 = vmatpush1.bf16.msra.mxu0 %v568
        %687 = vmatprep.mubr.bf16.mxu0 %v345
        %688 = vmatmul.mubr.bf16.gmra.mrb[0].mxu0 %v344
        %v689 = vpop.f32.mrb[0].mxu0
        %v690 = vadd.f32 %v331, %v689
        %v691 = vpop.f32.mrb[0].mxu0
        %v692 = vpop.f32.mrb[0].mxu0
        %v693 = vpop.f32.mrb[0].mxu0
        %694 = vdwg.mxu0
        %695 = vmatprep.subr.bf16.mxu0 0
        %696 = vmatpush1.bf16.msra.mxu0 %v569
        %697 = vmatprep.subr.bf16.mxu0 0
        %698 = vmatpush1.bf16.msra.mxu0 %v570
        %699 = vmatprep.subr.bf16.mxu0 0
        %700 = vmatpush1.bf16.msra.mxu0 %v571
        %701 = vmatprep.subr.bf16.mxu0 0
        %702 = vmatpush1.bf16.msra.mxu0 %v572
        %703 = vmatprep.subr.bf16.mxu0 0
        %704 = vmatpush1.bf16.msra.mxu0 %v573
        %705 = vmatprep.subr.bf16.mxu0 0
        %706 = vmatpush1.bf16.msra.mxu0 %v574
        %707 = vmatprep.subr.bf16.mxu0 0
        %708 = vmatpush1.bf16.msra.mxu0 %v575
        %709 = vmatprep.subr.bf16.mxu0 0
        %710 = vmatpush1.bf16.msra.mxu0 %v576
        %711 = vmatprep.subr.bf16.mxu0 0
        %712 = vmatpush1.bf16.msra.mxu0 %v577
        %713 = vmatprep.subr.bf16.mxu0 0
        %714 = vmatpush1.bf16.msra.mxu0 %v578
        %715 = vmatprep.subr.bf16.mxu0 0
        %716 = vmatpush1.bf16.msra.mxu0 %v579
        %717 = vmatprep.subr.bf16.mxu0 0
        %718 = vmatpush1.bf16.msra.mxu0 %v580
        %719 = vmatprep.subr.bf16.mxu0 0
        %720 = vmatpush1.bf16.msra.mxu0 %v581
        %721 = vmatprep.subr.bf16.mxu0 0
        %722 = vmatpush1.bf16.msra.mxu0 %v582
        %723 = vmatprep.subr.bf16.mxu0 0
        %724 = vmatpush1.bf16.msra.mxu0 %v583
        %725 = vmatprep.subr.bf16.mxu0 0
        %726 = vmatpush1.bf16.msra.mxu0 %v584
        %727 = vmatprep.mubr.bf16.mxu0 %v347
        %728 = vmatmul.mubr.bf16.gmra.mrb[0].mxu0 %v346
        %v729 = vpop.f32.mrb[0].mxu0
        %v730 = vadd.f32 %v690, %v729
        %v731 = vpop.f32.mrb[0].mxu0
        %v732 = vpop.f32.mrb[0].mxu0
        %v733 = vpop.f32.mrb[0].mxu0
        %734 = vdwg.mxu0
        %735 = vmatprep.subr.bf16.mxu0 0
        %736 = vmatpush1.bf16.msra.mxu0 %v585
        %737 = vmatprep.subr.bf16.mxu0 0
        %738 = vmatpush1.bf16.msra.mxu0 %v586
        %739 = vmatprep.subr.bf16.mxu0 0
        %740 = vmatpush1.bf16.msra.mxu0 %v587
        %741 = vmatprep.subr.bf16.mxu0 0
        %742 = vmatpush1.bf16.msra.mxu0 %v588
        %743 = vmatprep.subr.bf16.mxu0 0
        %744 = vmatpush1.bf16.msra.mxu0 %v589
        %745 = vmatprep.subr.bf16.mxu0 0
        %746 = vmatpush1.bf16.msra.mxu0 %v590
        %747 = vmatprep.subr.bf16.mxu0 0
        %748 = vmatpush1.bf16.msra.mxu0 %v591
        %749 = vmatprep.subr.bf16.mxu0 0
        %750 = vmatpush1.bf16.msra.mxu0 %v592
        %751 = vmatprep.subr.bf16.mxu0 0
        %752 = vmatpush1.bf16.msra.mxu0 %v593
        %753 = vmatprep.subr.bf16.mxu0 0
        %754 = vmatpush1.bf16.msra.mxu0 %v594
        %755 = vmatprep.subr.bf16.mxu0 0
        %756 = vmatpush1.bf16.msra.mxu0 %v595
        %757 = vmatprep.subr.bf16.mxu0 0
        %758 = vmatpush1.bf16.msra.mxu0 %v596
        %759 = vmatprep.subr.bf16.mxu0 0
        %760 = vmatpush1.bf16.msra.mxu0 %v597
        %761 = vmatprep.subr.bf16.mxu0 0
        %762 = vmatpush1.bf16.msra.mxu0 %v598
        %763 = vmatprep.subr.bf16.mxu0 0
        %764 = vmatpush1.bf16.msra.mxu0 %v599
        %765 = vmatprep.subr.bf16.mxu0 0
        %766 = vmatpush1.bf16.msra.mxu0 %v600
        %767 = vmatprep.mubr.bf16.mxu0 %v349
        %768 = vmatmul.mubr.bf16.gmra.mrb[0].mxu0 %v348
        %v769 = vpop.f32.mrb[0].mxu0
        %v770 = vadd.f32 %v730, %v769
        %v771 = vpop.f32.mrb[0].mxu0
        %v772 = vpop.f32.mrb[0].mxu0
        %v773 = vpop.f32.mrb[0].mxu0
        %774 = vdwg.mxu0
        %775 = vmatprep.subr.bf16.mxu0 0
        %776 = vmatpush1.bf16.msra.mxu0 %v601
        %777 = vmatprep.subr.bf16.mxu0 0
        %778 = vmatpush1.bf16.msra.mxu0 0
        %779 = vmatprep.subr.bf16.mxu0 0
        %780 = vmatpush1.bf16.msra.mxu0 0
        %781 = vmatprep.subr.bf16.mxu0 0
        %782 = vmatpush1.bf16.msra.mxu0 0
        %783 = vmatprep.subr.bf16.mxu0 0
        %784 = vmatpush1.bf16.msra.mxu0 0
        %785 = vmatprep.subr.bf16.mxu0 0
        %786 = vmatpush1.bf16.msra.mxu0 0
        %787 = vmatprep.subr.bf16.mxu0 0
        %788 = vmatpush1.bf16.msra.mxu0 0
        %789 = vmatprep.subr.bf16.mxu0 0
        %790 = vmatpush1.bf16.msra.mxu0 0
        %791 = vmatprep.subr.bf16.mxu0 0
        %792 = vmatpush1.bf16.msra.mxu0 0
        %793 = vmatprep.subr.bf16.mxu0 0
        %794 = vmatpush1.bf16.msra.mxu0 0
        %795 = vmatprep.subr.bf16.mxu0 0
        %796 = vmatpush1.bf16.msra.mxu0 0
        %797 = vmatprep.subr.bf16.mxu0 0
        %798 = vmatpush1.bf16.msra.mxu0 0
        %799 = vmatprep.subr.bf16.mxu0 0
        %800 = vmatpush1.bf16.msra.mxu0 0
        %801 = vmatprep.subr.bf16.mxu0 0
        %802 = vmatpush1.bf16.msra.mxu0 0
        %803 = vmatprep.subr.bf16.mxu0 0
        %804 = vmatpush1.bf16.msra.mxu0 0
        %805 = vmatprep.subr.bf16.mxu0 0
        %806 = vmatpush1.bf16.msra.mxu0 0
        %807 = vmatprep.mubr.bf16.mxu0 0
        %808 = vmatmul.mubr.bf16.gmra.mrb[0].mxu0 %v653
        %v809 = vpop.f32.mrb[0].mxu0
        %v810 = vadd.f32 %v770, %v809
        %v811 = vpop.f32.mrb[0].mxu0
        %v812 = vpop.f32.mrb[0].mxu0
        %v813 = vpop.f32.mrb[0].mxu0
        %814 = vdwg.mxu0
        %v815 = vmax.f32 %v810, 0.0
        %v816 = vpack.c.bf16 %v815, %v815
        %v817 = vld [vmem:[%s3] sm:$0xf]
        %v818 = vld [vmem:[%s3 + $0x4] sm:$0xf]
        %v819 = vld [vmem:[%s3 + $0x8] sm:$0xf]
        %v820 = vld [vmem:[%s3 + $0xc] sm:$0xf]
        %v821 = vld [vmem:[%s3 + $0x10] sm:$0xf]
        %v822 = vld [vmem:[%s3 + $0x14] sm:$0xf]
        %v823 = vld [vmem:[%s3 + $0x18] sm:$0xf]
        %v824 = vld [vmem:[%s3 + $0x1c] sm:$0xf]
        %v825 = vld [vmem:[%s3 + $0x20] sm:$0xf]
        %v826 = vld [vmem:[%s3 + $0x24] sm:$0xf]
        %v827 = vld [vmem:[%s3 + $0x28] sm:$0xf]
        %v828 = vld [vmem:[%s3 + $0x2c] sm:$0xf]
        %v829 = vld [vmem:[%s3 + $0x30] sm:$0xf]
        %v830 = vld [vmem:[%s3 + $0x34] sm:$0xf]
        %v831 = vld [vmem:[%s3 + $0x38] sm:$0xf]
        %v832 = vld [vmem:[%s3 + $0x3c] sm:$0xf]
        %v833 = vld [vmem:[%s4] sm:$0x1]
        %v835 = vlaneseq
        %v836 = vshrl.u32 %v835, 7
        %v837 = vsub.s32 0, %v836
        %v838 = vrot.slane %v833, %v837
        %v856 = vunpack.c.l.b16 %v817
        %v857 = vunpack.c.l.b16 %v818
        %v858 = vunpack.c.l.b16 %v819
        %v859 = vunpack.c.l.b16 %v820
        %v860 = vunpack.c.l.b16 %v821
        %v861 = vunpack.c.l.b16 %v822
        %v862 = vunpack.c.l.b16 %v823
        %v863 = vunpack.c.l.b16 %v824
        %v864 = vunpack.c.l.b16 %v825
        %v865 = vunpack.c.l.b16 %v826
        %v866 = vunpack.c.l.b16 %v827
        %v867 = vunpack.c.l.b16 %v828
        %v868 = vunpack.c.l.b16 %v829
        %v869 = vunpack.c.l.b16 %v830
        %v870 = vunpack.c.l.b16 %v831
        %v871 = vunpack.c.l.b16 %v832
        %v872 = vpack.c.b16 %v857, %v856
        %v873 = vpack.c.b16 %v859, %v858
        %v874 = vpack.c.b16 %v861, %v860
        %v875 = vpack.c.b16 %v863, %v862
        %v876 = vpack.c.b16 %v865, %v864
        %v877 = vpack.c.b16 %v867, %v866
        %v878 = vpack.c.b16 %v869, %v868
        %v879 = vpack.c.b16 %v871, %v870
        %888 = vmatprep.subr.bf16.mxu0 0
        %889 = vmatpush1.bf16.msra.mxu0 %v872
        %890 = vmatprep.subr.bf16.mxu0 0
        %891 = vmatpush1.bf16.msra.mxu0 %v873
        %892 = vmatprep.subr.bf16.mxu0 0
        %893 = vmatpush1.bf16.msra.mxu0 %v874
        %894 = vmatprep.subr.bf16.mxu0 0
        %895 = vmatpush1.bf16.msra.mxu0 %v875
        %896 = vmatprep.subr.bf16.mxu0 0
        %897 = vmatpush1.bf16.msra.mxu0 %v876
        %898 = vmatprep.subr.bf16.mxu0 0
        %899 = vmatpush1.bf16.msra.mxu0 %v877
        %900 = vmatprep.subr.bf16.mxu0 0
        %901 = vmatpush1.bf16.msra.mxu0 %v878
        %902 = vmatprep.subr.bf16.mxu0 0
        %903 = vmatpush1.bf16.msra.mxu0 %v879
        %904 = vmatprep.subr.bf16.mxu0 0
        %905 = vmatpush1.bf16.msra.mxu0 0
        %906 = vmatprep.subr.bf16.mxu0 0
        %907 = vmatpush1.bf16.msra.mxu0 0
        %908 = vmatprep.subr.bf16.mxu0 0
        %909 = vmatpush1.bf16.msra.mxu0 0
        %910 = vmatprep.subr.bf16.mxu0 0
        %911 = vmatpush1.bf16.msra.mxu0 0
        %912 = vmatprep.subr.bf16.mxu0 0
        %913 = vmatpush1.bf16.msra.mxu0 0
        %914 = vmatprep.subr.bf16.mxu0 0
        %915 = vmatpush1.bf16.msra.mxu0 0
        %916 = vmatprep.subr.bf16.mxu0 0
        %917 = vmatpush1.bf16.msra.mxu0 0
        %918 = vmatprep.subr.bf16.mxu0 0
        %919 = vmatpush1.bf16.msra.mxu0 0
        %920 = vmatprep.mubr.bf16.mxu0 0
        %921 = vmatmul.mubr.bf16.gmra.mrb[0].mxu0 %v816
        %v922 = vpop.f32.mrb[0].mxu0
        %v923 = vadd.f32 %v838, %v922
        %v924 = vpop.f32.mrb[0].mxu0
        %v925 = vpop.f32.mrb[0].mxu0
        %v926 = vpop.f32.mrb[0].mxu0
        %927 = vdwg.mxu0
        %928 = vmax.xlane.f32.xlu0 %v923
        %v929 = vpop.xlane.xlu0 %928
        %v930 = vsub.f32 %v923, %v929
        %v931 = vmul.f32 %v930, 1.442695
        %v932 = vpow.pop %v931
        %933 = vadd.xlane.f32.xlu0 %v932
        %v934 = vpop.xlane.xlu0 %933
        %v935 = vlog2.pop %v934
        %v936 = vmul.f32 %v935, 0.6931472
        %v937 = vsub.f32 %v930, %v936
        %938 = vst [vmem:[%s217] sm:$0xff] %v937
        %s939 = sand.u32 %s137, 1
        %s940 = scalar_lea.sflag [#allocation3], %s939
        %s941 = sand.u32 %s137, 1
        %s942 = smul.addr %s941, 8
        %s943 = scalar_lea.vmem [#allocation2], %s942
        // Predicated region
        $region41: #{perceptron_forward.1} parent=39 // pred_check
          %p944 = pneg %p147
        $region42: #{perceptron_forward.1} parent=39 // pred_check_branch
          %946 = sbr.rel (%p944) target = $region44
        $region43: #{perceptron_forward.1} parent=39 // pred_region
          %s948 = ssub.s32 128, 128
          %949 = vsyncadd %s940, %s948
          %s950 = smul.addr %s19, 128
          %s951 = scalar_lea.hbm %s5, %s950
          %s953 = sshll.u32 %s943, 4
          %s954 = int_to_ptr.vmem [resolvable:$true] %s953
          %956 = dma.vmem_to_hbm [thread:$0]  %s954, 128, %s951, %s940
        $region44: #{perceptron_forward.1} parent=39 // pred_fallthru
          _
      $region40: #{perceptron_forward.1} parent=5 // pred_fallthru
        _
      %p957 = scmp.le.s32.totalorder 2, %s14
      // Predicated region
      $region45: #{perceptron_forward.1} parent=5 // pred_check
        %p958 = pneg %p957
      $region46: #{perceptron_forward.1} parent=5 // pred_check_branch
        %960 = sbr.rel (%p958) target = $region48
      $region47: #{perceptron_forward.1} parent=5 // pred_region
        %s961 = ssub.s32 %s14, 2
        // Predicated region
        $region49: #{perceptron_forward.1} parent=47 // pred_check
          %p962 = pneg %p153
        $region50: #{perceptron_forward.1} parent=47 // pred_check_branch
          %964 = sbr.rel (%p962) target = $region52
        $region51: #{perceptron_forward.1} parent=47 // pred_region
          %s965 = sand.u32 %s138, 1
          %s966 = scalar_lea.sflag [#allocation3], %s965
          %s967 = sand.u32 %s138, 1
          %s968 = smul.addr %s967, 8
          %s969 = scalar_lea.vmem [#allocation2], %s968
          %970 = dma.done %s966, 128
        $region52: #{perceptron_forward.1} parent=47 // pred_fallthru
          _
      $region48: #{perceptron_forward.1} parent=5 // pred_fallthru
        _
    $region6: #{perceptron_forward.1} parent=1 // loop_footer
      %s18 = sadd.s32 1, %s14
    $region7: #{perceptron_forward.1} parent=1 // loop_footer_branch
      %13 = sbr.rel target = $region3
    $region8: #{perceptron_forward.1} parent=1 // loop_exit
      _
    %971 = vsyncpa [#allocation3], 1
    %s972 = scalar_lea.sflag [#allocation3], 1
    %973 = vsyncpa %s972, 1

</llo_original>
